<compile_context>
chip_gen: v7x
topology: tpu7x:2x2x1
jax: 0.10.0
libtpu: 0.0.40
codegen_flags: <defaults>
</compile_context>

<pallas_src>
import jax
import jax.numpy as jnp
from jax import lax
from jax.experimental import pallas as pl
from jax.experimental.pallas import tpu as pltpu

LANE = 128


def _round_up(x, m):
    return (x + m - 1) // m * m


def _pad2d(a, rows, cols):
    return jnp.pad(a, ((0, rows - a.shape[0]), (0, cols - a.shape[1])))


def _vmem_limit_bytes():
    """Per-generation VMEM budget: ~3/4 of physical, capped at 96 MiB.

    v5e/v6e (128 MiB physical) -> 96 MiB; v7x (64 MiB per TC) -> 48 MiB.
    Falls back to a conservative 48 MiB if the query is unavailable.
    """
    phys = 64 * 1024 * 1024
    try:
        phys = int(pltpu.get_tpu_info().vmem_capacity_bytes)
    except Exception:
        pass
    return max(32 * 1024 * 1024, min(phys * 3 // 4, 96 * 1024 * 1024))


def _plan_tiles(n):
    """Choose (n_pad, tm, tk).

    Pads N UP to the target tile instead of shrinking the tile to a divisor of
    N (512+ contraction tiles hit ~85% of HBM roofline vs ~29% at 128), and
    keeps >= 2 row tiles whenever possible so the 'parallel' axis splits across
    both TensorCores on v7x.
    """
    n_lane = _round_up(n, LANE)
    if n_lane <= 512:
        n_pad = n_lane
        tk = n_pad
        tm = n_pad // 2 if n_pad >= 2 * LANE else n_pad
        return n_pad, tm, tk
    tm = 512
    n_pad = _round_up(n_lane, tm)
    tk = tm
    for cand in (2048, 1536, 1024, 512):
        if cand <= n_pad and n_pad % cand == 0:
            tk = cand
            break
    return n_pad, tm, tk


# --------------------------------------------------------------------------
# Fused GCN layer kernel:  out = A @ (X @ W) + b   (optional ReLU)
#   grid = (rows_of_A / tm [parallel], cols_of_A / tk [arbitrary])
#   W, bias resident; X either fully resident (sliced in-kernel) or streamed.
# --------------------------------------------------------------------------
def _make_fused_kernel(relu, resident_x, tk):
    def kernel(a_ref, x_ref, w_ref, b_ref, o_ref, acc_ref):
        k = pl.program_id(1)

        @pl.when(k == 0)
        def _init():
            acc_ref[...] = jnp.zeros_like(acc_ref)

        if resident_x:
            start = pl.multiple_of(k * tk, LANE)
            x_blk = x_ref[pl.ds(start, tk), :]
        else:
            x_blk = x_ref[...]

        # Feature transform for this contraction block (f32 acc on the MXU),
        # then aggregate into the resident f32 accumulator.
        xw = jnp.dot(x_blk, w_ref[...], preferred_element_type=jnp.float32)
        acc_ref[...] += jnp.dot(
            a_ref[...], xw.astype(jnp.bfloat16),
            preferred_element_type=jnp.float32,
        )

        @pl.when(k == pl.num_programs(1) - 1)
        def _finalize():
            r = acc_ref[...] + b_ref[...]
            if relu:
                r = jnp.maximum(r, 0.0)
            o_ref[...] = r.astype(o_ref.dtype)

    return kernel


def _gcn_layer(a_p, x_p, w_p, b_p, *, relu, out_dtype, tm, tk, vmem_limit):
    n_pad = a_p.shape[0]
    c_pad = x_p.shape[1]
    h_pad = w_p.shape[1]
    out_itemsize = jnp.dtype(out_dtype).itemsize

    # Streaming working set (double-buffered blocks) + accumulator.
    stream_bytes = (
        2 * tm * tk * 2              # A blocks (bf16)
        + 2 * tk * c_pad * 2         # streamed X blocks (worst case)
        + 2 * c_pad * h_pad * 2      # resident W (count x2 to be safe)
        + 2 * h_pad * 4              # bias
        + 2 * tm * h_pad * out_itemsize
        + tm * h_pad * 4             # f32 accumulator
    )
    resident_bytes = 2 * n_pad * c_pad * 2  # full X, pessimistically x2
    headroom = 8 * 1024 * 1024
    resident_x = stream_bytes + resident_bytes + headroom <= vmem_limit

    if resident_x:
        x_spec = pl.BlockSpec((n_pad, c_pad), lambda i, k: (0, 0))
        x_reads = 1                      # loaded once, kept in VMEM
    else:
        x_spec = pl.BlockSpec((tk, c_pad), lambda i, k: (k, 0))
        x_reads = n_pad // tm            # re-streamed once per row tile

    grid = (n_pad // tm, n_pad // tk)
    flops = 2 * n_pad * n_pad * h_pad + 2 * n_pad * n_pad * c_pad * h_pad // tm
    bytes_accessed = int(
        n_pad * n_pad * 2                    # A
        + x_reads * n_pad * c_pad * 2        # X (resident or re-streamed)
        + c_pad * h_pad * 2 + h_pad * 4      # W, bias
        + n_pad * h_pad * out_itemsize       # output
    )

    return pl.pallas_call(
        _make_fused_kernel(relu, resident_x, tk),
        out_shape=jax.ShapeDtypeStruct((n_pad, h_pad), out_dtype),
        grid_spec=pltpu.PrefetchScalarGridSpec(
            num_scalar_prefetch=0,
            grid=grid,
            in_specs=[
                pl.BlockSpec((tm, tk), lambda i, k: (i, k)),          # A tile
                x_spec,                                               # X
                pl.BlockSpec((c_pad, h_pad), lambda i, k: (0, 0)),    # W resident
                pl.BlockSpec((1, h_pad), lambda i, k: (0, 0)),        # bias
            ],
            out_specs=pl.BlockSpec((tm, h_pad), lambda i, k: (i, 0)),
            scratch_shapes=[pltpu.VMEM((tm, h_pad), jnp.float32)],
        ),
        compiler_params=pltpu.CompilerParams(
            dimension_semantics=("parallel", "arbitrary"),
            vmem_limit_bytes=vmem_limit,
        ),
        cost_estimate=pl.CostEstimate(
            flops=flops, transcendentals=0, bytes_accessed=bytes_accessed
        ),
    )(a_p, x_p, w_p, b_p)


# --------------------------------------------------------------------------
# Full GCNEnc forward
# --------------------------------------------------------------------------
def gcn_enc_pallas(a_norm, x, w1, b1, w2, b2):
    n, c = x.shape
    hidden = w1.shape[1]
    out_channels = w2.shape[1]

    n_pad, tm, tk = _plan_tiles(n)
    c_pad = _round_up(c, LANE)
    h_pad = _round_up(hidden, LANE)
    o_pad = _round_up(out_channels, LANE)
    vmem_limit = _vmem_limit_bytes()

    # Lane-dense padding; MXU operands in bf16, f32 accumulation in-kernel.
    a_p = _pad2d(a_norm, n_pad, n_pad).astype(jnp.bfloat16)
    x_p = _pad2d(x, n_pad, c_pad).astype(jnp.bfloat16)
    w1_p = _pad2d(w1, c_pad, h_pad).astype(jnp.bfloat16)
    w2_p = _pad2d(w2, h_pad, o_pad).astype(jnp.bfloat16)
    b1_p = _pad2d(b1, 1, h_pad).astype(jnp.float32)
    b2_p = _pad2d(b2, 1, o_pad).astype(jnp.float32)

    # ---- GCNConv 1: relu(A @ (X @ W1) + b1)  (one fused kernel) ----
    h = _gcn_layer(a_p, x_p, w1_p, b1_p, relu=True, out_dtype=jnp.bfloat16,
                   tm=tm, tk=tk, vmem_limit=vmem_limit)

    # ---- Dropout: eval-mode identity ----
    # TODO(synk): training-mode F.dropout would need pltpu.prng_seed /
    # prng_random_bits inside the layer-1 epilogue.

    # ---- GCNConv 2: A @ (h @ W2) + b2  (one fused kernel) ----
    out = _gcn_layer(a_p, h, w2_p, b2_p, relu=False, out_dtype=jnp.float32,
                     tm=tm, tk=tk, vmem_limit=vmem_limit)

    return out[:n, :out_channels]


# --------------------------------------------------------------------------
# Graph densification (PyG GCNConv normalization) + reference
# --------------------------------------------------------------------------
def build_norm_adjacency(edge_index, num_nodes):
    """Dense symmetric-normalized adjacency, PyG gcn_norm semantics.

    Matches add_remaining_self_loops: existing self-loop edges are dropped and
    exactly one unit self-loop is added per node, so graphs that already
    contain self-loops are not double counted.  Degrees = row sums of the
    dense message matrix (i.e. scatter over the target index).
    """
    src = edge_index[0]
    dst = edge_index[1]
    w = jnp.where(src == dst, 0.0, 1.0).astype(jnp.float32)
    a = jnp.zeros((num_nodes, num_nodes), jnp.float32).at[dst, src].add(w)
    a = a + jnp.eye(num_nodes, dtype=jnp.float32)
    deg = a.sum(axis=1)
    dinv = jnp.where(deg > 0, lax.rsqrt(deg), 0.0)
    return dinv[:, None] * a * dinv[None, :]


def glorot(key, shape):
    fan_in, fan_out = shape
    limit = jnp.sqrt(6.0 / (fan_in + fan_out))
    return jax.random.uniform(key, shape, jnp.float32, -limit, limit)


def gcn_enc_reference(a_norm, x, w1, b1, w2, b2):
    """Mirrors the kernel math: bf16 MXU inputs, f32 accumulation."""
    bf = jnp.bfloat16
    a = a_norm.astype(bf)
    xw1 = jnp.dot(x.astype(bf), w1.astype(bf), preferred_element_type=jnp.float32)
    h = jnp.maximum(
        jnp.dot(a, xw1.astype(bf), preferred_element_type=jnp.float32) + b1, 0.0
    )
    xw2 = jnp.dot(h.astype(bf), w2.astype(bf), preferred_element_type=jnp.float32)
    return jnp.dot(a, xw2.astype(bf), preferred_element_type=jnp.float32) + b2


if __name__ == "__main__":
    key = jax.random.PRNGKey(0)
    k_x, k_e, k_w1, k_w2 = jax.random.split(key, 4)

    num_nodes = 16
    in_channels = 8
    out_channels = 4
    hidden = 2 * out_channels  # 8
    num_edges = 32

    # node features and random (undirected) edges
    x = jax.random.normal(k_x, (num_nodes, in_channels), jnp.float32)
    src = jax.random.randint(k_e, (num_edges,), 0, num_nodes, jnp.int32)
    dst = jnp.roll(src, 3)
    edge_index = jnp.stack(
        [jnp.concatenate([src, dst]), jnp.concatenate([dst, src])], axis=0
    )

    # deterministic parameter init (GCNConv: weight [in, out], bias [out])
    w1 = glorot(k_w1, (in_channels, hidden))
    b1 = jnp.zeros((1, hidden), jnp.float32)
    w2 = glorot(k_w2, (hidden, out_channels))
    b2 = jnp.zeros((1, out_channels), jnp.float32)

    a_norm = build_norm_adjacency(edge_index, num_nodes)

    out = gcn_enc_pallas(a_norm, x, w1, b1, w2, b2)
    out = jax.block_until_ready(out)

    ref = gcn_enc_reference(a_norm, x, w1, b1, w2, b2)
    assert out.shape == (num_nodes, out_channels)
    assert jnp.allclose(out, ref, atol=2e-3, rtol=2e-3), float(
        jnp.max(jnp.abs(out - ref))
    )

    print("KERNEL_OK")
</pallas_src>

<mosaic_0001>
module attributes {stable_mosaic.version = 11 : i64} {
  func.func @kernel(%arg0: i32, %arg1: i32, %arg2: memref<128x128xbf16, #tpu.memory_space<vmem>>, %arg3: memref<128x128xbf16, #tpu.memory_space<vmem>>, %arg4: memref<128x128xbf16, #tpu.memory_space<vmem>>, %arg5: memref<1x128xf32, #tpu.memory_space<vmem>>, %arg6: memref<128x128xbf16, #tpu.memory_space<vmem>>, %arg7: memref<128x128xf32, #tpu.memory_space<vmem>>) attributes {dimension_semantics = [#tpu.dimension_semantics<parallel>, #tpu.dimension_semantics<arbitrary>], iteration_bounds = array<i64: 1, 1>, scalar_prefetch = 0 : i64, scratch_operands = 1 : i64, tpu.core_type = #tpu.core_type<tc>, window_params = [{transform_indices = @transform_0, window_bounds = array<i64: 128, 128>}, {pipeline_mode = #tpu.pipeline_mode<synchronous>, transform_indices = @transform_1, window_bounds = array<i64: 128, 128>}, {pipeline_mode = #tpu.pipeline_mode<synchronous>, transform_indices = @transform_2, window_bounds = array<i64: 128, 128>}, {pipeline_mode = #tpu.pipeline_mode<synchronous>, transform_indices = @transform_3, window_bounds = array<i64: 1, 128>}, {transform_indices = @transform_4, window_bounds = array<i64: 128, 128>}]} {
    %c0_i32 = arith.constant 0 : i32
    %0 = arith.cmpi eq, %arg1, %c0_i32 : i32
    %1 = arith.extui %0 : i1 to i32
    %c0_i32_0 = arith.constant 0 : i32
    %2 = arith.cmpi ne, %1, %c0_i32_0 : i32
    scf.if %2 {
      %cst_12 = arith.constant 0.000000e+00 : f32
      %18 = vector.broadcast %cst_12 : f32 to vector<128x128xf32>
      %c0_13 = arith.constant 0 : index
      %c0_14 = arith.constant 0 : index
      %19 = vector.load %arg7[%c0_13, %c0_14] : memref<128x128xf32, #tpu.memory_space<vmem>>, vector<128x128xf32>
      tpu.vector_store %arg7[%c0_13, %c0_14], %18 {strides = array<i32>} : memref<128x128xf32, #tpu.memory_space<vmem>>, vector<128x128xf32>,
    } else {
    }
    %c128_i32 = arith.constant 128 : i32
    %3 = arith.muli %arg1, %c128_i32 : i32
    %4 = tpu.assume_multiple %3, 128 : i32
    %5 = arith.index_cast %4 : i32 to index
    %c0 = arith.constant 0 : index
    %6 = vector.load %arg3[%5, %c0] : memref<128x128xbf16, #tpu.memory_space<vmem>>, vector<128x128xbf16>
    %c0_1 = arith.constant 0 : index
    %c0_2 = arith.constant 0 : index
    %7 = vector.load %arg4[%c0_1, %c0_2] : memref<128x128xbf16, #tpu.memory_space<vmem>>, vector<128x128xbf16>
    %cst = arith.constant dense<0.000000e+00> : vector<128x128xf32>
    %8 = tpu.matmul %6, %7, %cst {dimension_numbers = #tpu.dot_dimension_numbers<[1], [0], [0], [1], [0, 0, 1, 1], [], []>} : vector<128x128xbf16>, vector<128x128xbf16>, vector<128x128xf32> -> vector<128x128xf32>
    %c0_3 = arith.constant 0 : index
    %c0_4 = arith.constant 0 : index
    %9 = vector.load %arg7[%c0_3, %c0_4] : memref<128x128xf32, #tpu.memory_space<vmem>>, vector<128x128xf32>
    %c0_5 = arith.constant 0 : index
    %c0_6 = arith.constant 0 : index
    %10 = vector.load %arg2[%c0_5, %c0_6] : memref<128x128xbf16, #tpu.memory_space<vmem>>, vector<128x128xbf16>
    %11 = arith.truncf %8 : vector<128x128xf32> to vector<128x128xbf16>
    %cst_7 = arith.constant dense<0.000000e+00> : vector<128x128xf32>
    %12 = tpu.matmul %10, %11, %cst_7 {dimension_numbers = #tpu.dot_dimension_numbers<[1], [0], [0], [1], [0, 0, 1, 1], [], []>} : vector<128x128xbf16>, vector<128x128xbf16>, vector<128x128xf32> -> vector<128x128xf32>
    %13 = arith.addf %9, %12 : vector<128x128xf32>
    %c0_8 = arith.constant 0 : index
    %c0_9 = arith.constant 0 : index
    %14 = vector.load %arg7[%c0_8, %c0_9] : memref<128x128xf32, #tpu.memory_space<vmem>>, vector<128x128xf32>
    tpu.vector_store %arg7[%c0_8, %c0_9], %13 {strides = array<i32>} : memref<128x128xf32, #tpu.memory_space<vmem>>, vector<128x128xf32>,
    %c0_i32_10 = arith.constant 0 : i32
    %15 = arith.cmpi eq, %arg1, %c0_i32_10 : i32
    %16 = arith.extui %15 : i1 to i32
    %c0_i32_11 = arith.constant 0 : i32
    %17 = arith.cmpi ne, %16, %c0_i32_11 : i32
    scf.if %17 {
      %c0_12 = arith.constant 0 : index
      %c0_13 = arith.constant 0 : index
      %18 = vector.load %arg7[%c0_12, %c0_13] : memref<128x128xf32, #tpu.memory_space<vmem>>, vector<128x128xf32>
      %c0_14 = arith.constant 0 : index
      %c0_15 = arith.constant 0 : index
      %19 = vector.load %arg5[%c0_14, %c0_15] : memref<1x128xf32, #tpu.memory_space<vmem>>, vector<1x128xf32>
      %20 = vector.broadcast %19 : vector<1x128xf32> to vector<128x128xf32>
      %21 = arith.addf %18, %20 : vector<128x128xf32>
      %cst_16 = arith.constant 0.000000e+00 : f32
      %22 = vector.broadcast %cst_16 : f32 to vector<128x128xf32>
      %23 = arith.maximumf %21, %22 : vector<128x128xf32>
      %24 = arith.truncf %23 : vector<128x128xf32> to vector<128x128xbf16>
      %c0_17 = arith.constant 0 : index
      %c0_18 = arith.constant 0 : index
      %25 = vector.load %arg6[%c0_17, %c0_18] : memref<128x128xbf16, #tpu.memory_space<vmem>>, vector<128x128xbf16>
      tpu.vector_store %arg6[%c0_17, %c0_18], %24 {strides = array<i32>} : memref<128x128xbf16, #tpu.memory_space<vmem>>, vector<128x128xbf16>,
    } else {
    }
    return
  }
  func.func @transform_0(%arg0: i32, %arg1: i32) -> (i32, i32) {
    %c0_i32 = arith.constant 0 : i32
    return %arg0, %arg1 : i32, i32
  }
  func.func @transform_1(%arg0: i32, %arg1: i32) -> (i32, i32) {
    %c0_i32 = arith.constant 0 : i32
    %c0_i32_0 = arith.constant 0 : i32
    %c0_i32_1 = arith.constant 0 : i32
    return %c0_i32, %c0_i32_0 : i32, i32
  }
  func.func @transform_2(%arg0: i32, %arg1: i32) -> (i32, i32) {
    %c0_i32 = arith.constant 0 : i32
    %c0_i32_0 = arith.constant 0 : i32
    %c0_i32_1 = arith.constant 0 : i32
    return %c0_i32, %c0_i32_0 : i32, i32
  }
  func.func @transform_3(%arg0: i32, %arg1: i32) -> (i32, i32) {
    %c0_i32 = arith.constant 0 : i32
    %c0_i32_0 = arith.constant 0 : i32
    %c0_i32_1 = arith.constant 0 : i32
    return %c0_i32, %c0_i32_0 : i32, i32
  }
  func.func @transform_4(%arg0: i32, %arg1: i32) -> (i32, i32) {
    %c0_i32 = arith.constant 0 : i32
    %c0_i32_0 = arith.constant 0 : i32
    return %arg0, %c0_i32 : i32, i32
  }
}

</mosaic_0001>

<llo_original>
// kernel: tpu_custom_call.1
$region0: #{tpu_custom_call.1}
  #allocation0 [shape = 'u32[]', space=smem, size = 0x4, offset = 0x4, fixed_abs, tag = 'smem constant byte address 0x4 - core index']
  #allocation1 [shape = 'u32[144,128]{1,0:T(1,128)}', space=vmem, size = 0x12000, scoped, tag = 'internal scratch']
  #allocation2 [shape = 'f32[128,128]{1,0:T(8,128)}', space=vmem, size = 0x10000, scoped, tag = 'scratch operand']
  %s0 = inlined_call_operand.hbm [shape: bf16[128,128], index: 0, kind: input, shape index: {}]
  %s1 = inlined_call_operand.hbm [shape: bf16[128,128], index: 1, kind: input, shape index: {}]
  %s2 = inlined_call_operand.hbm [shape: bf16[128,128], index: 2, kind: input, shape index: {}]
  %s3 = inlined_call_operand.vmem [shape: f32[1,128], index: 3, kind: input, shape index: {}]
  %s4 = inlined_call_operand.hbm [shape: bf16[128,128], index: 4, kind: output, shape index: {}]
  %s5 = sld [smem:[#allocation0]]
  $region46: #{tpu_custom_call.1} parent=0
    _
  %s7 = ssub.s32 1, %s5
  %s8 = scalar_select 0, %s7, %s5
  $region1: #{tpu_custom_call.1} parent=0
    #allocation3 [shape = 'u8[32768]{0}', space=vmem, size = 0x8000, scoped, tag = 'input window, operand 0, single buffered']
    #allocation4 [shape = 's32[1]{0}', space=sflag, size = 0x4, scoped, tag = 'scoped memory for tpu_custom_call.1']
    #allocation5 [shape = 's32[1]{0}', space=sflag, size = 0x4, scoped, tag = 'scoped memory for tpu_custom_call.1']
    #allocation6 [shape = 'u8[32768]{0}', space=vmem, size = 0x8000, scoped, tag = 'input window, operand 1, single buffered']
    #allocation7 [shape = 's32[1]{0}', space=sflag, size = 0x4, scoped, tag = 'scoped memory for tpu_custom_call.1']
    #allocation8 [shape = 'u8[32768]{0}', space=vmem, size = 0x8000, scoped, tag = 'input window, operand 2, single buffered']
    #allocation9 [shape = 'u8[32768]{0}', space=vmem, size = 0x8000, scoped, tag = 'output window, operand 0, single buffered']
    %9 = vsyncpa [#allocation4], 0
    %10 = vsyncpa [#allocation7], 0
    %11 = vsyncpa [#allocation5], 0
    // Predicated region
    $region2: #{tpu_custom_call.1} parent=1 // pred_check
      _
    $region3: #{tpu_custom_call.1} parent=1 // pred_check_branch
      %13 = sbr.rel (0) target = $region5
    $region4: #{tpu_custom_call.1} parent=1 // pred_region
      %s15 = ssub.s32 1024, 1024
      %16 = vsyncadd [#allocation4], %s15
      %s17 = sshll.u32 [#allocation3], 4
      %s18 = int_to_ptr.vmem [resolvable:$true] %s17
      %23 = dma.hbm_to_vmem [thread:$0]  %s0, 1024, %s18, [#allocation4], 64, 64, 4
    $region5: #{tpu_custom_call.1} parent=1 // pred_fallthru
      _
    // Predicated region
    $region6: #{tpu_custom_call.1} parent=1 // pred_check
      _
    $region7: #{tpu_custom_call.1} parent=1 // pred_check_branch
      %25 = sbr.rel (0) target = $region9
    $region8: #{tpu_custom_call.1} parent=1 // pred_region
      %s27 = ssub.s32 1024, 1024
      %28 = vsyncadd [#allocation7], %s27
      %s29 = sshll.u32 [#allocation6], 4
      %s30 = int_to_ptr.vmem [resolvable:$true] %s29
      %35 = dma.hbm_to_vmem [thread:$0]  %s1, 1024, %s30, [#allocation7], 64, 64, 4
    $region9: #{tpu_custom_call.1} parent=1 // pred_fallthru
      _
    // Predicated region
    $region10: #{tpu_custom_call.1} parent=1 // pred_check
      _
    $region11: #{tpu_custom_call.1} parent=1 // pred_check_branch
      %37 = sbr.rel (0) target = $region13
    $region12: #{tpu_custom_call.1} parent=1 // pred_region
      %s39 = ssub.s32 1024, 1024
      %40 = vsyncadd [#allocation7], %s39
      %s41 = sshll.u32 [#allocation8], 4
      %s42 = int_to_ptr.vmem [resolvable:$true] %s41
      %47 = dma.hbm_to_vmem [thread:$0]  %s2, 1024, %s42, [#allocation7], 64, 64, 4
    $region13: #{tpu_custom_call.1} parent=1 // pred_fallthru
      _
    // Predicated region
    $region14: #{tpu_custom_call.1} parent=1 // pred_check
      _
    $region15: #{tpu_custom_call.1} parent=1 // pred_check_branch
      %49 = sbr.rel (0) target = $region17
    $region16: #{tpu_custom_call.1} parent=1 // pred_region
      _
    $region17: #{tpu_custom_call.1} parent=1 // pred_fallthru
      _
    // Predicated region
    $region18: #{tpu_custom_call.1} parent=1 // pred_check
      _
    $region19: #{tpu_custom_call.1} parent=1 // pred_check_branch
      %51 = sbr.rel (0) target = $region21
    $region20: #{tpu_custom_call.1} parent=1 // pred_region
      %52 = dma.done [#allocation4], 1024
    $region21: #{tpu_custom_call.1} parent=1 // pred_fallthru
      _
    // Predicated region
    $region22: #{tpu_custom_call.1} parent=1 // pred_check
      _
    $region23: #{tpu_custom_call.1} parent=1 // pred_check_branch
      %54 = sbr.rel (0) target = $region25
    $region24: #{tpu_custom_call.1} parent=1 // pred_region
      %55 = dma.done [#allocation7], 1024
    $region25: #{tpu_custom_call.1} parent=1 // pred_fallthru
      _
    // Predicated region
    $region26: #{tpu_custom_call.1} parent=1 // pred_check
      _
    $region27: #{tpu_custom_call.1} parent=1 // pred_check_branch
      %57 = sbr.rel (0) target = $region29
    $region28: #{tpu_custom_call.1} parent=1 // pred_region
      %58 = dma.done [#allocation7], 1024
    $region29: #{tpu_custom_call.1} parent=1 // pred_fallthru
      _
    %p60 = scmp.eq.s32.totalorder 0, 0
    // Predicated region
    $region30: #{tpu_custom_call.1} parent=1 // pred_check
      %p61 = pneg %p60
    $region31: #{tpu_custom_call.1} parent=1 // pred_check_branch
      %63 = sbr.rel (%p61) target = $region33
    $region32: #{tpu_custom_call.1} parent=1 // pred_region
      %64 = vst [vmem:[#allocation2] sm:$0xff] 0.0
      %65 = vst [vmem:[#allocation2 + $0x8] sm:$0xff] 0.0
      %66 = vst [vmem:[#allocation2 + $0x10] sm:$0xff] 0.0
      %67 = vst [vmem:[#allocation2 + $0x18] sm:$0xff] 0.0
      %68 = vst [vmem:[#allocation2 + $0x20] sm:$0xff] 0.0
      %69 = vst [vmem:[#allocation2 + $0x28] sm:$0xff] 0.0
      %70 = vst [vmem:[#allocation2 + $0x30] sm:$0xff] 0.0
      %71 = vst [vmem:[#allocation2 + $0x38] sm:$0xff] 0.0
      %72 = vst [vmem:[#allocation2 + $0x40] sm:$0xff] 0.0
      %73 = vst [vmem:[#allocation2 + $0x48] sm:$0xff] 0.0
      %74 = vst [vmem:[#allocation2 + $0x50] sm:$0xff] 0.0
      %75 = vst [vmem:[#allocation2 + $0x58] sm:$0xff] 0.0
      %76 = vst [vmem:[#allocation2 + $0x60] sm:$0xff] 0.0
      %77 = vst [vmem:[#allocation2 + $0x68] sm:$0xff] 0.0
      %78 = vst [vmem:[#allocation2 + $0x70] sm:$0xff] 0.0
      %79 = vst [vmem:[#allocation2 + $0x78] sm:$0xff] 0.0
    $region33: #{tpu_custom_call.1} parent=1 // pred_fallthru
      _
    %s80 = smul.u32 0, 128
    %s81 = sshra.s32 %s80, 3
    %s82 = sand.u32 %s80, 7
    %s83 = smul.addr %s81, 4
    %s84 = scalar_lea.vmem [#allocation6], %s83
    %v85 = vld [vmem:[%s84] sm:$0xf]
    %v86 = vld [vmem:[%s84 + $0x4] sm:$0xf]
    %v87 = vld [vmem:[%s84 + $0x8] sm:$0xf]
    %v88 = vld [vmem:[%s84 + $0xc] sm:$0xf]
    %v89 = vld [vmem:[%s84 + $0x10] sm:$0xf]
    %v90 = vld [vmem:[%s84 + $0x14] sm:$0xf]
    %v91 = vld [vmem:[%s84 + $0x18] sm:$0xf]
    %v92 = vld [vmem:[%s84 + $0x1c] sm:$0xf]
    %v93 = vld [vmem:[%s84 + $0x20] sm:$0xf]
    %v94 = vld [vmem:[%s84 + $0x24] sm:$0xf]
    %v95 = vld [vmem:[%s84 + $0x28] sm:$0xf]
    %v96 = vld [vmem:[%s84 + $0x2c] sm:$0xf]
    %v97 = vld [vmem:[%s84 + $0x30] sm:$0xf]
    %v98 = vld [vmem:[%s84 + $0x34] sm:$0xf]
    %v99 = vld [vmem:[%s84 + $0x38] sm:$0xf]
    %v100 = vld [vmem:[%s84 + $0x3c] sm:$0xf]
    %v101 = vld [vmem:[#allocation8] sm:$0xf]
    %v102 = vld [vmem:[#allocation8 + $0x4] sm:$0xf]
    %v103 = vld [vmem:[#allocation8 + $0x8] sm:$0xf]
    %v104 = vld [vmem:[#allocation8 + $0xc] sm:$0xf]
    %v105 = vld [vmem:[#allocation8 + $0x10] sm:$0xf]
    %v106 = vld [vmem:[#allocation8 + $0x14] sm:$0xf]
    %v107 = vld [vmem:[#allocation8 + $0x18] sm:$0xf]
    %v108 = vld [vmem:[#allocation8 + $0x1c] sm:$0xf]
    %v109 = vld [vmem:[#allocation8 + $0x20] sm:$0xf]
    %v110 = vld [vmem:[#allocation8 + $0x24] sm:$0xf]
    %v111 = vld [vmem:[#allocation8 + $0x28] sm:$0xf]
    %v112 = vld [vmem:[#allocation8 + $0x2c] sm:$0xf]
    %v113 = vld [vmem:[#allocation8 + $0x30] sm:$0xf]
    %v114 = vld [vmem:[#allocation8 + $0x34] sm:$0xf]
    %v115 = vld [vmem:[#allocation8 + $0x38] sm:$0xf]
    %v116 = vld [vmem:[#allocation8 + $0x3c] sm:$0xf]
    %v133 = vunpack.c.l.b16 %v85
    %v134 = vunpack.c.l.b16 %v86
    %v135 = vunpack.c.l.b16 %v87
    %v136 = vunpack.c.l.b16 %v88
    %v137 = vunpack.c.l.b16 %v89
    %v138 = vunpack.c.l.b16 %v90
    %v139 = vunpack.c.l.b16 %v91
    %v140 = vunpack.c.l.b16 %v92
    %v141 = vunpack.c.l.b16 %v93
    %v142 = vunpack.c.l.b16 %v94
    %v143 = vunpack.c.l.b16 %v95
    %v144 = vunpack.c.l.b16 %v96
    %v145 = vunpack.c.l.b16 %v97
    %v146 = vunpack.c.l.b16 %v98
    %v147 = vunpack.c.l.b16 %v99
    %v148 = vunpack.c.l.b16 %v100
    %v149 = vpack.c.b16 %v134, %v133
    %v150 = vpack.c.b16 %v136, %v135
    %v151 = vpack.c.b16 %v138, %v137
    %v152 = vpack.c.b16 %v140, %v139
    %v153 = vpack.c.b16 %v142, %v141
    %v154 = vpack.c.b16 %v144, %v143
    %v155 = vpack.c.b16 %v146, %v145
    %v156 = vpack.c.b16 %v148, %v147
    %v181 = vunpack.c.l.b16 %v101
    %v182 = vunpack.c.l.b16 %v102
    %v183 = vunpack.c.l.b16 %v103
    %v184 = vunpack.c.l.b16 %v104
    %v185 = vunpack.c.l.b16 %v105
    %v186 = vunpack.c.l.b16 %v106
    %v187 = vunpack.c.l.b16 %v107
    %v188 = vunpack.c.l.b16 %v108
    %v189 = vunpack.c.l.b16 %v109
    %v190 = vunpack.c.l.b16 %v110
    %v191 = vunpack.c.l.b16 %v111
    %v192 = vunpack.c.l.b16 %v112
    %v193 = vunpack.c.l.b16 %v113
    %v194 = vunpack.c.l.b16 %v114
    %v195 = vunpack.c.l.b16 %v115
    %v196 = vunpack.c.l.b16 %v116
    %v197 = vpack.c.b16 %v182, %v181
    %v198 = vpack.c.b16 %v184, %v183
    %v199 = vpack.c.b16 %v186, %v185
    %v200 = vpack.c.b16 %v188, %v187
    %v201 = vpack.c.b16 %v190, %v189
    %v202 = vpack.c.b16 %v192, %v191
    %v203 = vpack.c.b16 %v194, %v193
    %v204 = vpack.c.b16 %v196, %v195
    %213 = vmatprep.subr.bf16.mxu0 0
    %214 = vmatpush1.bf16.msra.mxu0 %v197
    %215 = vmatprep.subr.bf16.mxu0 0
    %216 = vmatpush1.bf16.msra.mxu0 %v198
    %217 = vmatprep.subr.bf16.mxu0 0
    %218 = vmatpush1.bf16.msra.mxu0 %v199
    %219 = vmatprep.subr.bf16.mxu0 0
    %220 = vmatpush1.bf16.msra.mxu0 %v200
    %221 = vmatprep.subr.bf16.mxu0 0
    %222 = vmatpush1.bf16.msra.mxu0 %v201
    %223 = vmatprep.subr.bf16.mxu0 0
    %224 = vmatpush1.bf16.msra.mxu0 %v202
    %225 = vmatprep.subr.bf16.mxu0 0
    %226 = vmatpush1.bf16.msra.mxu0 %v203
    %227 = vmatprep.subr.bf16.mxu0 0
    %228 = vmatpush1.bf16.msra.mxu0 %v204
    %229 = vmatprep.subr.bf16.mxu0 0
    %230 = vmatpush1.bf16.msra.mxu0 0
    %231 = vmatprep.subr.bf16.mxu0 0
    %232 = vmatpush1.bf16.msra.mxu0 0
    %233 = vmatprep.subr.bf16.mxu0 0
    %234 = vmatpush1.bf16.msra.mxu0 0
    %235 = vmatprep.subr.bf16.mxu0 0
    %236 = vmatpush1.bf16.msra.mxu0 0
    %237 = vmatprep.subr.bf16.mxu0 0
    %238 = vmatpush1.bf16.msra.mxu0 0
    %239 = vmatprep.subr.bf16.mxu0 0
    %240 = vmatpush1.bf16.msra.mxu0 0
    %241 = vmatprep.subr.bf16.mxu0 0
    %242 = vmatpush1.bf16.msra.mxu0 0
    %243 = vmatprep.subr.bf16.mxu0 0
    %244 = vmatpush1.bf16.msra.mxu0 0
    %245 = vmatprep.mubr.bf16.mxu0 0
    %246 = vmatmul.mubr.bf16.gmra.mrb[0].mxu0 %v149
    %v247 = vpop.f32.mrb[0].mxu0
    %v248 = vadd.f32 0.0, %v247
    %v249 = vpop.f32.mrb[0].mxu0
    %v250 = vpop.f32.mrb[0].mxu0
    %v251 = vadd.f32 0.0, %v250
    %v252 = vpop.f32.mrb[0].mxu0
    %253 = vmatprep.mubr.bf16.mxu0 0
    %254 = vmatmul.mubr.bf16.gmra.mrb[0].mxu0 %v150
    %v255 = vpop.f32.mrb[0].mxu0
    %v256 = vadd.f32 0.0, %v255
    %v257 = vpop.f32.mrb[0].mxu0
    %v258 = vpop.f32.mrb[0].mxu0
    %v259 = vadd.f32 0.0, %v258
    %v260 = vpop.f32.mrb[0].mxu0
    %261 = vmatprep.mubr.bf16.mxu0 0
    %262 = vmatmul.mubr.bf16.gmra.mrb[0].mxu0 %v151
    %v263 = vpop.f32.mrb[0].mxu0
    %v264 = vadd.f32 0.0, %v263
    %v265 = vpop.f32.mrb[0].mxu0
    %v266 = vpop.f32.mrb[0].mxu0
    %v267 = vadd.f32 0.0, %v266
    %v268 = vpop.f32.mrb[0].mxu0
    %269 = vmatprep.mubr.bf16.mxu0 0
    %270 = vmatmul.mubr.bf16.gmra.mrb[0].mxu0 %v152
    %v271 = vpop.f32.mrb[0].mxu0
    %v272 = vadd.f32 0.0, %v271
    %v273 = vpop.f32.mrb[0].mxu0
    %v274 = vpop.f32.mrb[0].mxu0
    %v275 = vadd.f32 0.0, %v274
    %v276 = vpop.f32.mrb[0].mxu0
    %277 = vmatprep.mubr.bf16.mxu0 0
    %278 = vmatmul.mubr.bf16.gmra.mrb[0].mxu0 %v153
    %v279 = vpop.f32.mrb[0].mxu0
    %v280 = vadd.f32 0.0, %v279
    %v281 = vpop.f32.mrb[0].mxu0
    %v282 = vpop.f32.mrb[0].mxu0
    %v283 = vadd.f32 0.0, %v282
    %v284 = vpop.f32.mrb[0].mxu0
    %285 = vmatprep.mubr.bf16.mxu0 0
    %286 = vmatmul.mubr.bf16.gmra.mrb[0].mxu0 %v154
    %v287 = vpop.f32.mrb[0].mxu0
    %v288 = vadd.f32 0.0, %v287
    %v289 = vpop.f32.mrb[0].mxu0
    %v290 = vpop.f32.mrb[0].mxu0
    %v291 = vadd.f32 0.0, %v290
    %v292 = vpop.f32.mrb[0].mxu0
    %293 = vmatprep.mubr.bf16.mxu0 0
    %294 = vmatmul.mubr.bf16.gmra.mrb[0].mxu0 %v155
    %v295 = vpop.f32.mrb[0].mxu0
    %v296 = vadd.f32 0.0, %v295
    %v297 = vpop.f32.mrb[0].mxu0
    %v298 = vpop.f32.mrb[0].mxu0
    %v299 = vadd.f32 0.0, %v298
    %v300 = vpop.f32.mrb[0].mxu0
    %301 = vmatprep.mubr.bf16.mxu0 0
    %302 = vmatmul.mubr.bf16.gmra.mrb[0].mxu0 %v156
    %v303 = vpop.f32.mrb[0].mxu0
    %v304 = vadd.f32 0.0, %v303
    %v305 = vpop.f32.mrb[0].mxu0
    %v306 = vpop.f32.mrb[0].mxu0
    %v307 = vadd.f32 0.0, %v306
    %v308 = vpop.f32.mrb[0].mxu0
    %309 = vdwg.mxu0
    %v310 = vld [vmem:[#allocation2] sm:$0xff]
    %v311 = vld [vmem:[#allocation2 + $0x8] sm:$0xff]
    %v312 = vld [vmem:[#allocation2 + $0x10] sm:$0xff]
    %v313 = vld [vmem:[#allocation2 + $0x18] sm:$0xff]
    %v314 = vld [vmem:[#allocation2 + $0x20] sm:$0xff]
    %v315 = vld [vmem:[#allocation2 + $0x28] sm:$0xff]
    %v316 = vld [vmem:[#allocation2 + $0x30] sm:$0xff]
    %v317 = vld [vmem:[#allocation2 + $0x38] sm:$0xff]
    %v318 = vld [vmem:[#allocation2 + $0x40] sm:$0xff]
    %v319 = vld [vmem:[#allocation2 + $0x48] sm:$0xff]
    %v320 = vld [vmem:[#allocation2 + $0x50] sm:$0xff]
    %v321 = vld [vmem:[#allocation2 + $0x58] sm:$0xff]
    %v322 = vld [vmem:[#allocation2 + $0x60] sm:$0xff]
    %v323 = vld [vmem:[#allocation2 + $0x68] sm:$0xff]
    %v324 = vld [vmem:[#allocation2 + $0x70] sm:$0xff]
    %v325 = vld [vmem:[#allocation2 + $0x78] sm:$0xff]
    %v326 = vld [vmem:[#allocation3] sm:$0xf]
    %v327 = vld [vmem:[#allocation3 + $0x4] sm:$0xf]
    %v328 = vld [vmem:[#allocation3 + $0x8] sm:$0xf]
    %v329 = vld [vmem:[#allocation3 + $0xc] sm:$0xf]
    %v330 = vld [vmem:[#allocation3 + $0x10] sm:$0xf]
    %v331 = vld [vmem:[#allocation3 + $0x14] sm:$0xf]
    %v332 = vld [vmem:[#allocation3 + $0x18] sm:$0xf]
    %v333 = vld [vmem:[#allocation3 + $0x1c] sm:$0xf]
    %v334 = vld [vmem:[#allocation3 + $0x20] sm:$0xf]
    %v335 = vld [vmem:[#allocation3 + $0x24] sm:$0xf]
    %v336 = vld [vmem:[#allocation3 + $0x28] sm:$0xf]
    %v337 = vld [vmem:[#allocation3 + $0x2c] sm:$0xf]
    %v338 = vld [vmem:[#allocation3 + $0x30] sm:$0xf]
    %v339 = vld [vmem:[#allocation3 + $0x34] sm:$0xf]
    %v340 = vld [vmem:[#allocation3 + $0x38] sm:$0xf]
    %v341 = vld [vmem:[#allocation3 + $0x3c] sm:$0xf]
    %v342 = vpack.c.bf16 %v251, %v248
    %v343 = vpack.c.bf16 %v259, %v256
    %v344 = vpack.c.bf16 %v267, %v264
    %v345 = vpack.c.bf16 %v275, %v272
    %v346 = vpack.c.bf16 %v283, %v280
    %v347 = vpack.c.bf16 %v291, %v288
    %v348 = vpack.c.bf16 %v299, %v296
    %v349 = vpack.c.bf16 %v307, %v304
    %v366 = vunpack.c.l.b16 %v326
    %v367 = vunpack.c.l.b16 %v327
    %v368 = vunpack.c.l.b16 %v328
    %v369 = vunpack.c.l.b16 %v329
    %v370 = vunpack.c.l.b16 %v330
    %v371 = vunpack.c.l.b16 %v331
    %v372 = vunpack.c.l.b16 %v332
    %v373 = vunpack.c.l.b16 %v333
    %v374 = vunpack.c.l.b16 %v334
    %v375 = vunpack.c.l.b16 %v335
    %v376 = vunpack.c.l.b16 %v336
    %v377 = vunpack.c.l.b16 %v337
    %v378 = vunpack.c.l.b16 %v338
    %v379 = vunpack.c.l.b16 %v339
    %v380 = vunpack.c.l.b16 %v340
    %v381 = vunpack.c.l.b16 %v341
    %v382 = vpack.c.b16 %v367, %v366
    %v383 = vpack.c.b16 %v369, %v368
    %v384 = vpack.c.b16 %v371, %v370
    %v385 = vpack.c.b16 %v373, %v372
    %v386 = vpack.c.b16 %v375, %v374
    %v387 = vpack.c.b16 %v377, %v376
    %v388 = vpack.c.b16 %v379, %v378
    %v389 = vpack.c.b16 %v381, %v380
    %398 = vmatprep.subr.bf16.mxu0 0
    %399 = vmatpush1.bf16.msra.mxu0 %v342
    %400 = vmatprep.subr.bf16.mxu0 0
    %401 = vmatpush1.bf16.msra.mxu0 %v343
    %402 = vmatprep.subr.bf16.mxu0 0
    %403 = vmatpush1.bf16.msra.mxu0 %v344
    %404 = vmatprep.subr.bf16.mxu0 0
    %405 = vmatpush1.bf16.msra.mxu0 %v345
    %406 = vmatprep.subr.bf16.mxu0 0
    %407 = vmatpush1.bf16.msra.mxu0 %v346
    %408 = vmatprep.subr.bf16.mxu0 0
    %409 = vmatpush1.bf16.msra.mxu0 %v347
    %410 = vmatprep.subr.bf16.mxu0 0
    %411 = vmatpush1.bf16.msra.mxu0 %v348
    %412 = vmatprep.subr.bf16.mxu0 0
    %413 = vmatpush1.bf16.msra.mxu0 %v349
    %414 = vmatprep.subr.bf16.mxu0 0
    %415 = vmatpush1.bf16.msra.mxu0 0
    %416 = vmatprep.subr.bf16.mxu0 0
    %417 = vmatpush1.bf16.msra.mxu0 0
    %418 = vmatprep.subr.bf16.mxu0 0
    %419 = vmatpush1.bf16.msra.mxu0 0
    %420 = vmatprep.subr.bf16.mxu0 0
    %421 = vmatpush1.bf16.msra.mxu0 0
    %422 = vmatprep.subr.bf16.mxu0 0
    %423 = vmatpush1.bf16.msra.mxu0 0
    %424 = vmatprep.subr.bf16.mxu0 0
    %425 = vmatpush1.bf16.msra.mxu0 0
    %426 = vmatprep.subr.bf16.mxu0 0
    %427 = vmatpush1.bf16.msra.mxu0 0
    %428 = vmatprep.subr.bf16.mxu0 0
    %429 = vmatpush1.bf16.msra.mxu0 0
    %430 = vmatprep.mubr.bf16.mxu0 0
    %431 = vmatmul.mubr.bf16.gmra.mrb[0].mxu0 %v382
    %v432 = vpop.f32.mrb[0].mxu0
    %v433 = vadd.f32 0.0, %v432
    %v434 = vpop.f32.mrb[0].mxu0
    %v435 = vpop.f32.mrb[0].mxu0
    %v436 = vadd.f32 0.0, %v435
    %v437 = vpop.f32.mrb[0].mxu0
    %438 = vmatprep.mubr.bf16.mxu0 0
    %439 = vmatmul.mubr.bf16.gmra.mrb[0].mxu0 %v383
    %v440 = vpop.f32.mrb[0].mxu0
    %v441 = vadd.f32 0.0, %v440
    %v442 = vpop.f32.mrb[0].mxu0
    %v443 = vpop.f32.mrb[0].mxu0
    %v444 = vadd.f32 0.0, %v443
    %v445 = vpop.f32.mrb[0].mxu0
    %446 = vmatprep.mubr.bf16.mxu0 0
    %447 = vmatmul.mubr.bf16.gmra.mrb[0].mxu0 %v384
    %v448 = vpop.f32.mrb[0].mxu0
    %v449 = vadd.f32 0.0, %v448
    %v450 = vpop.f32.mrb[0].mxu0
    %v451 = vpop.f32.mrb[0].mxu0
    %v452 = vadd.f32 0.0, %v451
    %v453 = vpop.f32.mrb[0].mxu0
    %454 = vmatprep.mubr.bf16.mxu0 0
    %455 = vmatmul.mubr.bf16.gmra.mrb[0].mxu0 %v385
    %v456 = vpop.f32.mrb[0].mxu0
    %v457 = vadd.f32 0.0, %v456
    %v458 = vpop.f32.mrb[0].mxu0
    %v459 = vpop.f32.mrb[0].mxu0
    %v460 = vadd.f32 0.0, %v459
    %v461 = vpop.f32.mrb[0].mxu0
    %462 = vmatprep.mubr.bf16.mxu0 0
    %463 = vmatmul.mubr.bf16.gmra.mrb[0].mxu0 %v386
    %v464 = vpop.f32.mrb[0].mxu0
    %v465 = vadd.f32 0.0, %v464
    %v466 = vpop.f32.mrb[0].mxu0
    %v467 = vpop.f32.mrb[0].mxu0
    %v468 = vadd.f32 0.0, %v467
    %v469 = vpop.f32.mrb[0].mxu0
    %470 = vmatprep.mubr.bf16.mxu0 0
    %471 = vmatmul.mubr.bf16.gmra.mrb[0].mxu0 %v387
    %v472 = vpop.f32.mrb[0].mxu0
    %v473 = vadd.f32 0.0, %v472
    %v474 = vpop.f32.mrb[0].mxu0
    %v475 = vpop.f32.mrb[0].mxu0
    %v476 = vadd.f32 0.0, %v475
    %v477 = vpop.f32.mrb[0].mxu0
    %478 = vmatprep.mubr.bf16.mxu0 0
    %479 = vmatmul.mubr.bf16.gmra.mrb[0].mxu0 %v388
    %v480 = vpop.f32.mrb[0].mxu0
    %v481 = vadd.f32 0.0, %v480
    %v482 = vpop.f32.mrb[0].mxu0
    %v483 = vpop.f32.mrb[0].mxu0
    %v484 = vadd.f32 0.0, %v483
    %v485 = vpop.f32.mrb[0].mxu0
    %486 = vmatprep.mubr.bf16.mxu0 0
    %487 = vmatmul.mubr.bf16.gmra.mrb[0].mxu0 %v389
    %v488 = vpop.f32.mrb[0].mxu0
    %v489 = vadd.f32 0.0, %v488
    %v490 = vpop.f32.mrb[0].mxu0
    %v491 = vpop.f32.mrb[0].mxu0
    %v492 = vadd.f32 0.0, %v491
    %v493 = vpop.f32.mrb[0].mxu0
    %494 = vdwg.mxu0
    %v495 = vadd.f32 %v310, %v433
    %v496 = vadd.f32 %v311, %v436
    %v497 = vadd.f32 %v312, %v441
    %v498 = vadd.f32 %v313, %v444
    %v499 = vadd.f32 %v314, %v449
    %v500 = vadd.f32 %v315, %v452
    %v501 = vadd.f32 %v316, %v457
    %v502 = vadd.f32 %v317, %v460
    %v503 = vadd.f32 %v318, %v465
    %v504 = vadd.f32 %v319, %v468
    %v505 = vadd.f32 %v320, %v473
    %v506 = vadd.f32 %v321, %v476
    %v507 = vadd.f32 %v322, %v481
    %v508 = vadd.f32 %v323, %v484
    %v509 = vadd.f32 %v324, %v489
    %v510 = vadd.f32 %v325, %v492
    %511 = vst [vmem:[#allocation2] sm:$0xff] %v495
    %512 = vst [vmem:[#allocation2 + $0x8] sm:$0xff] %v496
    %513 = vst [vmem:[#allocation2 + $0x10] sm:$0xff] %v497
    %514 = vst [vmem:[#allocation2 + $0x18] sm:$0xff] %v498
    %515 = vst [vmem:[#allocation2 + $0x20] sm:$0xff] %v499
    %516 = vst [vmem:[#allocation2 + $0x28] sm:$0xff] %v500
    %517 = vst [vmem:[#allocation2 + $0x30] sm:$0xff] %v501
    %518 = vst [vmem:[#allocation2 + $0x38] sm:$0xff] %v502
    %519 = vst [vmem:[#allocation2 + $0x40] sm:$0xff] %v503
    %520 = vst [vmem:[#allocation2 + $0x48] sm:$0xff] %v504
    %521 = vst [vmem:[#allocation2 + $0x50] sm:$0xff] %v505
    %522 = vst [vmem:[#allocation2 + $0x58] sm:$0xff] %v506
    %523 = vst [vmem:[#allocation2 + $0x60] sm:$0xff] %v507
    %524 = vst [vmem:[#allocation2 + $0x68] sm:$0xff] %v508
    %525 = vst [vmem:[#allocation2 + $0x70] sm:$0xff] %v509
    %526 = vst [vmem:[#allocation2 + $0x78] sm:$0xff] %v510
    // Predicated region
    $region34: #{tpu_custom_call.1} parent=1 // pred_check
      %p527 = pneg %p60
    $region35: #{tpu_custom_call.1} parent=1 // pred_check_branch
      %529 = sbr.rel (%p527) target = $region37
    $region36: #{tpu_custom_call.1} parent=1 // pred_region
      %v530 = vld [vmem:[#allocation2] sm:$0xff]
      %v531 = vld [vmem:[#allocation2 + $0x8] sm:$0xff]
      %v532 = vld [vmem:[#allocation2 + $0x10] sm:$0xff]
      %v533 = vld [vmem:[#allocation2 + $0x18] sm:$0xff]
      %v534 = vld [vmem:[#allocation2 + $0x20] sm:$0xff]
      %v535 = vld [vmem:[#allocation2 + $0x28] sm:$0xff]
      %v536 = vld [vmem:[#allocation2 + $0x30] sm:$0xff]
      %v537 = vld [vmem:[#allocation2 + $0x38] sm:$0xff]
      %v538 = vld [vmem:[#allocation2 + $0x40] sm:$0xff]
      %v539 = vld [vmem:[#allocation2 + $0x48] sm:$0xff]
      %v540 = vld [vmem:[#allocation2 + $0x50] sm:$0xff]
      %v541 = vld [vmem:[#allocation2 + $0x58] sm:$0xff]
      %v542 = vld [vmem:[#allocation2 + $0x60] sm:$0xff]
      %v543 = vld [vmem:[#allocation2 + $0x68] sm:$0xff]
      %v544 = vld [vmem:[#allocation2 + $0x70] sm:$0xff]
      %v545 = vld [vmem:[#allocation2 + $0x78] sm:$0xff]
      %v546 = vld [vmem:[%s3] sm:$0x1]
      %v548 = vlaneseq
      %v549 = vshrl.u32 %v548, 7
      %v550 = vsub.s32 0, %v549
      %v551 = vrot.slane %v546, %v550
      %v553 = vadd.f32 %v530, %v551
      %v554 = vadd.f32 %v531, %v551
      %v555 = vadd.f32 %v532, %v551
      %v556 = vadd.f32 %v533, %v551
      %v557 = vadd.f32 %v534, %v551
      %v558 = vadd.f32 %v535, %v551
      %v559 = vadd.f32 %v536, %v551
      %v560 = vadd.f32 %v537, %v551
      %v561 = vadd.f32 %v538, %v551
      %v562 = vadd.f32 %v539, %v551
      %v563 = vadd.f32 %v540, %v551
      %v564 = vadd.f32 %v541, %v551
      %v565 = vadd.f32 %v542, %v551
      %v566 = vadd.f32 %v543, %v551
      %v567 = vadd.f32 %v544, %v551
      %v568 = vadd.f32 %v545, %v551
      %v569 = vmax.f32 %v553, 0.0
      %v570 = vmax.f32 %v554, 0.0
      %v571 = vmax.f32 %v555, 0.0
      %v572 = vmax.f32 %v556, 0.0
      %v573 = vmax.f32 %v557, 0.0
      %v574 = vmax.f32 %v558, 0.0
      %v575 = vmax.f32 %v559, 0.0
      %v576 = vmax.f32 %v560, 0.0
      %v577 = vmax.f32 %v561, 0.0
      %v578 = vmax.f32 %v562, 0.0
      %v579 = vmax.f32 %v563, 0.0
      %v580 = vmax.f32 %v564, 0.0
      %v581 = vmax.f32 %v565, 0.0
      %v582 = vmax.f32 %v566, 0.0
      %v583 = vmax.f32 %v567, 0.0
      %v584 = vmax.f32 %v568, 0.0
      %v585 = vpack.c.bf16 %v570, %v569
      %v586 = vpack.c.bf16 %v572, %v571
      %v587 = vpack.c.bf16 %v574, %v573
      %v588 = vpack.c.bf16 %v576, %v575
      %v589 = vpack.c.bf16 %v578, %v577
      %v590 = vpack.c.bf16 %v580, %v579
      %v591 = vpack.c.bf16 %v582, %v581
      %v592 = vpack.c.bf16 %v584, %v583
      %v601 = vunpack.c.l.b16 %v585
      %v602 = vunpack.c.h.b16 %v585
      %v603 = vunpack.c.l.b16 %v586
      %v604 = vunpack.c.h.b16 %v586
      %v605 = vunpack.c.l.b16 %v587
      %v606 = vunpack.c.h.b16 %v587
      %v607 = vunpack.c.l.b16 %v588
      %v608 = vunpack.c.h.b16 %v588
      %v609 = vunpack.c.l.b16 %v589
      %v610 = vunpack.c.h.b16 %v589
      %v611 = vunpack.c.l.b16 %v590
      %v612 = vunpack.c.h.b16 %v590
      %v613 = vunpack.c.l.b16 %v591
      %v614 = vunpack.c.h.b16 %v591
      %v615 = vunpack.c.l.b16 %v592
      %v616 = vunpack.c.h.b16 %v592
      %v617 = vpack.c.b16 %v601, %v601
      %v618 = vpack.c.b16 %v602, %v602
      %v619 = vpack.c.b16 %v603, %v603
      %v620 = vpack.c.b16 %v604, %v604
      %v621 = vpack.c.b16 %v605, %v605
      %v622 = vpack.c.b16 %v606, %v606
      %v623 = vpack.c.b16 %v607, %v607
      %v624 = vpack.c.b16 %v608, %v608
      %v625 = vpack.c.b16 %v609, %v609
      %v626 = vpack.c.b16 %v610, %v610
      %v627 = vpack.c.b16 %v611, %v611
      %v628 = vpack.c.b16 %v612, %v612
      %v629 = vpack.c.b16 %v613, %v613
      %v630 = vpack.c.b16 %v614, %v614
      %v631 = vpack.c.b16 %v615, %v615
      %v632 = vpack.c.b16 %v616, %v616
      %649 = vst [vmem:[#allocation9] sm:$0xf] %v617
      %650 = vst [vmem:[#allocation9 + $0x4] sm:$0xf] %v618
      %651 = vst [vmem:[#allocation9 + $0x8] sm:$0xf] %v619
      %652 = vst [vmem:[#allocation9 + $0xc] sm:$0xf] %v620
      %653 = vst [vmem:[#allocation9 + $0x10] sm:$0xf] %v621
      %654 = vst [vmem:[#allocation9 + $0x14] sm:$0xf] %v622
      %655 = vst [vmem:[#allocation9 + $0x18] sm:$0xf] %v623
      %656 = vst [vmem:[#allocation9 + $0x1c] sm:$0xf] %v624
      %657 = vst [vmem:[#allocation9 + $0x20] sm:$0xf] %v625
      %658 = vst [vmem:[#allocation9 + $0x24] sm:$0xf] %v626
      %659 = vst [vmem:[#allocation9 + $0x28] sm:$0xf] %v627
      %660 = vst [vmem:[#allocation9 + $0x2c] sm:$0xf] %v628
      %661 = vst [vmem:[#allocation9 + $0x30] sm:$0xf] %v629
      %662 = vst [vmem:[#allocation9 + $0x34] sm:$0xf] %v630
      %663 = vst [vmem:[#allocation9 + $0x38] sm:$0xf] %v631
      %664 = vst [vmem:[#allocation9 + $0x3c] sm:$0xf] %v632
    $region37: #{tpu_custom_call.1} parent=1 // pred_fallthru
      _
    // Predicated region
    $region38: #{tpu_custom_call.1} parent=1 // pred_check
      _
    $region39: #{tpu_custom_call.1} parent=1 // pred_check_branch
      %666 = sbr.rel (0) target = $region41
    $region40: #{tpu_custom_call.1} parent=1 // pred_region
      %s668 = ssub.s32 1024, 1024
      %669 = vsyncadd [#allocation5], %s668
      %s670 = sshll.u32 [#allocation9], 4
      %s671 = int_to_ptr.vmem [resolvable:$true] %s670
      %676 = dma.vmem_to_hbm [thread:$0]  %s671, 1024, %s4, [#allocation5], 64, 64, 4
    $region41: #{tpu_custom_call.1} parent=1 // pred_fallthru
      _
    // Predicated region
    $region42: #{tpu_custom_call.1} parent=1 // pred_check
      _
    $region43: #{tpu_custom_call.1} parent=1 // pred_check_branch
      %678 = sbr.rel (0) target = $region45
    $region44: #{tpu_custom_call.1} parent=1 // pred_region
      %679 = dma.done [#allocation5], 1024
    $region45: #{tpu_custom_call.1} parent=1 // pred_fallthru
      _
    %680 = vsyncpa [#allocation4], 1
    %681 = vsyncpa [#allocation7], 1
    %682 = vsyncpa [#allocation5], 1

</llo_original>
